<compile_context>
chip_gen: v6e
topology: v6e:2x2x1
jax: 0.10.0
libtpu: 0.0.40
codegen_flags: <defaults>
</compile_context>

<pallas_src>
import functools

import jax
import jax.numpy as jnp
from jax.experimental import pallas as pl
from jax.experimental.pallas import tpu as pltpu


def _round_up(x, m):
    return ((x + m - 1) // m) * m


def _vmem_budget_bytes():
    """Physical VMEM minus headroom for compiler-internal scratch (generation aware)."""
    cap = 64 * 1024 * 1024  # conservative fallback == v7x physical VMEM
    try:
        cap = int(pltpu.get_tpu_info().vmem_capacity_bytes)
    except Exception:
        pass
    # >= 20% / >= 12 MiB headroom: ~51 MiB on v7x (64 MiB), ~102 MiB on v5e/v6e (128 MiB).
    return min(int(cap * 0.8), cap - 12 * 1024 * 1024)


# --------------------------------------------------------------------------------------
# Kernel 1: hidden = text @ W   (batched, row-tiled, fully parallel grid)
# --------------------------------------------------------------------------------------
def _hidden_kernel(text_ref, w_ref, h_ref):
    # text_ref: (1, TNH, Fin_p), w_ref: (Fin_p, Fout_p), h_ref: (1, TNH, Fout_p)
    h_ref[0] = jnp.dot(
        text_ref[0], w_ref[...], preferred_element_type=jnp.float32
    ).astype(h_ref.dtype)


# --------------------------------------------------------------------------------------
# Kernel 2: out = (adj @ hidden) / (rowsum(adj) + 1) + bias, K-tiled over adj columns
# --------------------------------------------------------------------------------------
def _gcn_agg_kernel(adj_ref, hidden_ref, bias_ref, out_ref, acc_ref, den_ref,
                    *, tk, hidden_resident):
    # adj_ref:    (1, TN, TK)
    # hidden_ref: (1, N_pc, Fout_p) if hidden_resident (fetched once per batch)
    #             (1, TK,   Fout_p) otherwise (k-tiled)
    # bias_ref:   (1, Fout_p) f32
    # out_ref:    (1, TN, Fout_p)
    # acc_ref:    (TN, Fout_p) f32 scratch   den_ref: (TN, 1) f32 scratch
    k = pl.program_id(2)

    @pl.when(k == 0)
    def _():
        acc_ref[...] = jnp.zeros_like(acc_ref)
        den_ref[...] = jnp.zeros_like(den_ref)

    adj = adj_ref[0]                                                     # (TN, TK)
    # Exact row-sum accumulated in f32 (GCN normalization denominator).
    den_ref[...] += jnp.sum(adj.astype(jnp.float32), axis=-1, keepdims=True)

    if hidden_resident:
        off = pl.multiple_of(k * tk, 128)
        h = hidden_ref[0, pl.ds(off, tk), :]                             # (TK, Fout_p)
    else:
        h = hidden_ref[0]                                                # (TK, Fout_p)
    acc_ref[...] += jnp.dot(adj, h, preferred_element_type=jnp.float32)

    @pl.when(k == pl.num_programs(2) - 1)
    def _():
        out = acc_ref[...] / (den_ref[...] + 1.0)        # exact divide (denom >= 1)
        out = out + bias_ref[...].astype(jnp.float32)
        out_ref[0] = out.astype(out_ref.dtype)


# --------------------------------------------------------------------------------------
# Wrapper
# --------------------------------------------------------------------------------------
def graph_convolution(text, adj, weight, bias=None, *,
                      precision="bf16", max_tk=2048, hidden_resident=None):
    """GCN forward:  (adj @ (text @ W)) / (rowsum(adj) + 1) + bias.

    text: (B, N, Fin), adj: (B, N, N), weight: (Fin, Fout), bias: (Fout,) or None.
    precision:
      "f32"  -> exact float32 path (matches the PyTorch module).
      "bf16" -> adj/text/W/hidden cast to bfloat16, all accumulation in float32
                (exact for 0/1 adjacency; ~1e-3-level rel. error otherwise).
    max_tk: upper bound for the adjacency-column tile (K-tiling keeps VMEM bounded
            independent of N; must be a multiple of 128).
    hidden_resident: force whether the full per-batch hidden stays resident in VMEM
            (None = auto from the VMEM budget).
    """
    B, N, Fin = text.shape
    Fin_w, Fout = weight.shape
    assert Fin_w == Fin and adj.shape == (B, N, N)
    out_dtype = text.dtype
    if bias is None:
        bias = jnp.zeros((Fout,), dtype=jnp.float32)

    cdt = jnp.bfloat16 if precision == "bf16" else jnp.float32
    c_bytes = 2 if precision == "bf16" else 4
    out_bytes = jnp.dtype(out_dtype).itemsize

    # ---- tile / padding selection ----------------------------------------------------
    Fin_p = _round_up(Fin, 128)
    Fout_p = _round_up(Fout, 128)

    N_128 = _round_up(N, 128)          # always lane-dense, even for tiny N
    TN = min(256, N_128)               # 256 fills the 2x256x256 MXU on v6e/v7x;
                                       # on v5e (128x128 MXU) it is simply two passes.
    N_pr = _round_up(N, TN)            # adjacency / output rows

    # Column (contraction) tiling: nk steps of TK columns, padding waste < 128*nk cols.
    max_tk = max(128, _round_up(max_tk, 128))
    nk = max(1, -(-N_128 // max_tk))                   # ceil
    TK = _round_up(-(-N_128 // nk), 128)
    N_pc = TK * nk                                     # adjacency columns == hidden rows

    vmem_budget = _vmem_budget_bytes()
    if hidden_resident is None:
        # Keep the whole per-batch hidden resident (no HBM re-reads across row tiles)
        # unless its double-buffered footprint would eat too much of the budget.
        hidden_resident = (2 * N_pc * Fout_p * c_bytes) <= vmem_budget // 3

    # ---- zero padding (exact: padded rows/cols contribute nothing, sliced off) -------
    text_p = jnp.pad(text, ((0, 0), (0, N_pc - N), (0, Fin_p - Fin))).astype(cdt)
    adj_p = jnp.pad(adj, ((0, 0), (0, N_pr - N), (0, N_pc - N))).astype(cdt)
    w_p = jnp.pad(weight, ((0, Fin_p - Fin), (0, Fout_p - Fout))).astype(cdt)
    bias_p = jnp.pad(bias.astype(jnp.float32), ((0, Fout_p - Fout),)).reshape(1, Fout_p)

    # ---- kernel 1: hidden = text @ W --------------------------------------------------
    TNH = 256 if N_pc % 256 == 0 else 128
    hidden = pl.pallas_call(
        _hidden_kernel,
        out_shape=jax.ShapeDtypeStruct((B, N_pc, Fout_p), cdt),
        grid_spec=pltpu.PrefetchScalarGridSpec(
            num_scalar_prefetch=0,
            grid=(B, N_pc // TNH),
            in_specs=[
                pl.BlockSpec((1, TNH, Fin_p), lambda b, r: (b, r, 0)),
                pl.BlockSpec((Fin_p, Fout_p), lambda b, r: (0, 0)),
            ],
            out_specs=pl.BlockSpec((1, TNH, Fout_p), lambda b, r: (b, r, 0)),
        ),
        compiler_params=pltpu.CompilerParams(
            dimension_semantics=("parallel", "parallel"),
        ),
    )(text_p, w_p)

    # ---- kernel 2: aggregation --------------------------------------------------------
    if hidden_resident:
        hidden_spec = pl.BlockSpec((1, N_pc, Fout_p), lambda b, r, k: (b, 0, 0))
        hidden_vmem = 2 * N_pc * Fout_p * c_bytes
    else:
        hidden_spec = pl.BlockSpec((1, TK, Fout_p), lambda b, r, k: (b, k, 0))
        hidden_vmem = 2 * TK * Fout_p * c_bytes

    # VMEM accounting: every input/output BlockSpec is double-buffered by the pipeline.
    vmem_est = (
        2 * TN * TK * c_bytes            # adj tiles
        + hidden_vmem                    # hidden
        + 2 * 8 * Fout_p * 4             # bias (sublane-padded)
        + 2 * TN * Fout_p * out_bytes    # out tiles
        + TN * Fout_p * 4                # acc scratch
        + TN * 128 * 4                   # denom scratch (lane-padded)
    )
    vmem_limit = int(min(max(vmem_est * 5 // 4 + (4 << 20), 32 << 20), vmem_budget))

    kernel = functools.partial(_gcn_agg_kernel, tk=TK, hidden_resident=hidden_resident)
    out_p = pl.pallas_call(
        kernel,
        out_shape=jax.ShapeDtypeStruct((B, N_pr, Fout_p), out_dtype),
        grid_spec=pltpu.PrefetchScalarGridSpec(
            num_scalar_prefetch=0,
            grid=(B, N_pr // TN, nk),
            in_specs=[
                pl.BlockSpec((1, TN, TK), lambda b, r, k: (b, r, k)),    # adj tile
                hidden_spec,                                             # hidden
                pl.BlockSpec((1, Fout_p), lambda b, r, k: (0, 0)),       # bias
            ],
            out_specs=pl.BlockSpec((1, TN, Fout_p), lambda b, r, k: (b, r, 0)),
            scratch_shapes=[
                pltpu.VMEM((TN, Fout_p), jnp.float32),   # agg accumulator
                pltpu.VMEM((TN, 1), jnp.float32),        # rowsum accumulator
            ],
        ),
        compiler_params=pltpu.CompilerParams(
            # No cross-step carry on b / r (only the k accumulator), so both
            # batch and row-tile axes are parallel -> both TCs on v7x even at B=1.
            dimension_semantics=("parallel", "parallel", "arbitrary"),
            vmem_limit_bytes=vmem_limit,
        ),
    )(adj_p, hidden, bias_p)

    return out_p[:, :N, :Fout]


def graph_convolution_ref(text, adj, weight, bias):
    hidden = jnp.matmul(text, weight, precision=jax.lax.Precision.HIGHEST)
    denom = jnp.sum(adj, axis=2, keepdims=True) + 1.0
    output = jnp.matmul(adj, hidden, precision=jax.lax.Precision.HIGHEST) / denom
    return output + bias


if __name__ == "__main__":
    # Small but non-trivial shapes: N is not a multiple of 128 and Fin/Fout are not
    # multiples of 128, so every padding / tiling path is exercised.
    B, N, Fin, Fout = 2, 200, 48, 40

    key = jax.random.PRNGKey(0)
    k_text, k_adj, k_w, k_b = jax.random.split(key, 4)

    text = jax.random.normal(k_text, (B, N, Fin), dtype=jnp.float32)
    adj = jax.random.uniform(k_adj, (B, N, N), dtype=jnp.float32)   # non-negative adjacency
    weight = jax.random.normal(k_w, (Fin, Fout), dtype=jnp.float32) * 0.1
    bias = jax.random.normal(k_b, (Fout,), dtype=jnp.float32) * 0.1

    ref = graph_convolution_ref(text, adj, weight, bias)

    # 1) Exact float32 path (single k step, resident hidden) -> tight tolerance.
    out_f32 = graph_convolution(text, adj, weight, bias, precision="f32")
    jax.block_until_ready(out_f32)
    assert out_f32.shape == (B, N, Fout)
    assert jnp.allclose(out_f32, ref, atol=1e-3, rtol=1e-3), (
        "f32 mismatch vs reference, max abs err = "
        f"{float(jnp.max(jnp.abs(out_f32 - ref)))}"
    )

    # 2) bf16 fast path, forcing the K-accumulation loop and the k-tiled hidden path.
    out_bf16 = graph_convolution(text, adj, weight, bias, precision="bf16",
                                 max_tk=128, hidden_resident=False)
    jax.block_until_ready(out_bf16)
    assert out_bf16.shape == (B, N, Fout)
    assert jnp.allclose(out_bf16, ref, atol=3e-2, rtol=3e-2), (
        "bf16 mismatch vs reference, max abs err = "
        f"{float(jnp.max(jnp.abs(out_bf16 - ref)))}"
    )

    print("KERNEL_OK")
</pallas_src>

<mosaic_0001>
module attributes {stable_mosaic.version = 11 : i64} {
  func.func @_hidden_kernel(%arg0: i32, %arg1: i32, %arg2: memref<1x256x128xf32, #tpu.memory_space<vmem>>, %arg3: memref<128x128xf32, #tpu.memory_space<vmem>>, %arg4: memref<1x256x128xf32, #tpu.memory_space<vmem>>) attributes {dimension_semantics = [#tpu.dimension_semantics<parallel>, #tpu.dimension_semantics<parallel>], iteration_bounds = array<i64: 2, 1>, scalar_prefetch = 0 : i64, scratch_operands = 0 : i64, tpu.core_type = #tpu.core_type<tc>, window_params = [{transform_indices = @transform_0, window_bounds = array<i64: 1, 256, 128>}, {pipeline_mode = #tpu.pipeline_mode<synchronous>, transform_indices = @transform_1, window_bounds = array<i64: 128, 128>}, {transform_indices = @transform_2, window_bounds = array<i64: 1, 256, 128>}]} {
    %c0 = arith.constant 0 : index
    %c0_0 = arith.constant 0 : index
    %c0_1 = arith.constant 0 : index
    %0 = vector.load %arg2[%c0, %c0_0, %c0_1] : memref<1x256x128xf32, #tpu.memory_space<vmem>>, vector<1x256x128xf32>
    %1 = vector.shape_cast %0 : vector<1x256x128xf32> to vector<256x128xf32>
    %c0_2 = arith.constant 0 : index
    %c0_3 = arith.constant 0 : index
    %2 = vector.load %arg3[%c0_2, %c0_3] : memref<128x128xf32, #tpu.memory_space<vmem>>, vector<128x128xf32>
    %cst = arith.constant dense<0.000000e+00> : vector<256x128xf32>
    %3 = tpu.matmul %1, %2, %cst {dimension_numbers = #tpu.dot_dimension_numbers<[1], [0], [0], [1], [0, 0, 1, 1], [], []>} : vector<256x128xf32>, vector<128x128xf32>, vector<256x128xf32> -> vector<256x128xf32>
    %c0_4 = arith.constant 0 : index
    %c0_5 = arith.constant 0 : index
    %c0_6 = arith.constant 0 : index
    %4 = vector.load %arg4[%c0_4, %c0_5, %c0_6] : memref<1x256x128xf32, #tpu.memory_space<vmem>>, vector<1x256x128xf32>
    %5 = vector.shape_cast %4 : vector<1x256x128xf32> to vector<256x128xf32>
    %6 = vector.shape_cast %3 : vector<256x128xf32> to vector<1x256x128xf32>
    tpu.vector_store %arg4[%c0_4, %c0_5, %c0_6], %6 {strides = array<i32>} : memref<1x256x128xf32, #tpu.memory_space<vmem>>, vector<1x256x128xf32>,
    return
  }
  func.func @transform_0(%arg0: i32, %arg1: i32) -> (i32, i32, i32) {
    %c0_i32 = arith.constant 0 : i32
    %c0_i32_0 = arith.constant 0 : i32
    return %arg0, %arg1, %c0_i32 : i32, i32, i32
  }
  func.func @transform_1(%arg0: i32, %arg1: i32) -> (i32, i32) {
    %c0_i32 = arith.constant 0 : i32
    %c0_i32_0 = arith.constant 0 : i32
    %c0_i32_1 = arith.constant 0 : i32
    return %c0_i32, %c0_i32_0 : i32, i32
  }
  func.func @transform_2(%arg0: i32, %arg1: i32) -> (i32, i32, i32) {
    %c0_i32 = arith.constant 0 : i32
    %c0_i32_0 = arith.constant 0 : i32
    return %arg0, %arg1, %c0_i32 : i32, i32, i32
  }
}

</mosaic_0001>

<llo_original>
// kernel: tpu_custom_call.1
$region0: #{tpu_custom_call.1}
  #allocation0 [shape = 'u32[]', space=smem, size = 0x4, offset = 0x4, fixed_abs, tag = 'smem constant byte address 0x4 - core index']
  #allocation1 [shape = 'u32[144,128]{1,0:T(1,128)}', space=vmem, size = 0x12000, scoped, tag = 'internal scratch']
  %s0 = inlined_call_operand.hbm [shape: f32[2,256,128], index: 0, kind: input, shape index: {}]
  %s1 = inlined_call_operand.hbm [shape: f32[128,128], index: 1, kind: input, shape index: {}]
  %s2 = inlined_call_operand.hbm [shape: f32[2,256,128], index: 2, kind: output, shape index: {}]
  %s3 = sld [smem:[#allocation0]]
  $region49: #{tpu_custom_call.1} parent=0
    _
  %s5 = ssub.s32 1, %s3
  %s6 = scalar_select 0, %s5, %s3
  $region1: #{tpu_custom_call.1} parent=0
    #allocation2 [shape = 'u8[262144]{0}', space=vmem, size = 0x40000, scoped, tag = 'input window, operand 0']
    #allocation3 [shape = 's32[2]{0}', space=sflag, size = 0x8, scoped, tag = 'scoped memory for tpu_custom_call.1']
    #allocation4 [shape = 's32[2]{0}', space=sflag, size = 0x8, scoped, tag = 'scoped memory for tpu_custom_call.1']
    #allocation5 [shape = 'u8[65536]{0}', space=vmem, size = 0x10000, scoped, tag = 'input window, operand 1, single buffered']
    #allocation6 [shape = 's32[1]{0}', space=sflag, size = 0x4, scoped, tag = 'scoped memory for tpu_custom_call.1']
    #allocation7 [shape = 'u8[262144]{0}', space=vmem, size = 0x40000, scoped, tag = 'output window, operand 0']
    %7 = vsyncpa [#allocation3], 0
    %s8 = scalar_lea.sflag [#allocation3], 1
    %9 = vsyncpa %s8, 0
    %10 = vsyncpa [#allocation6], 0
    %11 = vsyncpa [#allocation4], 0
    %s12 = scalar_lea.sflag [#allocation4], 1
    %13 = vsyncpa %s12, 0
    loop: start=0, step=1, limit=4
    $region2: #{tpu_custom_call.1} parent=1 // loop_pre_header
      _
    $region3: #{tpu_custom_call.1} parent=1 // loop_header
      %s15 = sphi 0, %s19
      %p16 = scmp.ge.s32.totalorder %s15, 4
      %s22 = sphi 0, %s34
      %s23 = sphi 0, %s30
      %s24 = sphi 0, %s22
      %s25 = sphi 0, %s23
      %s26 = sphi 0, %s24
      %s27 = sphi 0, %s25
      %s39 = sphi 0, %s41
      %s42 = sphi 0, %s39
      %s43 = sphi 0, %s42
      %s59 = sphi 0, %s43
      %s63 = sphi 0, %s63
      %s65 = sphi 0, %s63
      %s66 = sphi 0, %s65
      %s80 = sphi 0, %s66
      %s88 = sphi 0, %s90
      %s91 = sphi 0, %s88
      %s92 = sphi 0, %s91
      %s108 = sphi 0, %s92
    $region4: #{tpu_custom_call.1} parent=1 // loop_header_branch
      %18 = sbr.rel (%p16) target = $region8
    $region5: #{tpu_custom_call.1} parent=1 // loop_body
      %s20 = ssub.s32 %s15, 1
      %s21 = ssub.s32 %s15, 2
      %s28 = sadd.s32 1, %s23
      %p29 = scmp.ge.s32.totalorder %s28, 1
      %s30 = scalar_select %p29, 0, %s28
      %s31 = sadd.s32 1, %s22
      %s32 = scalar_select %p29, %s31, %s22
      %p33 = scmp.ge.s32.totalorder %s32, 2
      %s34 = scalar_select %p33, 0, %s32
      %s35 = ssub.s32 %s22, %s34
      %s36 = ssub.s32 %s23, %s30
      %s37 = sor.u32 %s35, %s36
      %p38 = scmp.eq.s32.totalorder %s37, 0
      %s40 = sadd.s32 %s39, 1
      %s41 = scalar_select %p38, %s39, %s40
      %p44 = pneg %p38
      %p45 = scmp.eq.s32.totalorder %s15, 1
      %p46 = por %p44, %p45
      %p47 = scmp.ne.s32.totalorder %s39, %s42
      %p48 = scmp.eq.s32.totalorder %s15, 0
      %p49 = por %p47, %p48
      %p50 = scmp.ne.s32.totalorder %s39, %s42
      %p51 = scmp.eq.s32.totalorder %s20, 1
      %p52 = por %p50, %p51
      %p53 = scmp.ne.s32.totalorder %s42, %s43
      %p54 = scmp.eq.s32.totalorder %s20, 0
      %p55 = por %p53, %p54
      %p56 = scmp.ne.s32.totalorder %s42, %s43
      %p57 = scmp.eq.s32.totalorder %s21, 1
      %p58 = por %p56, %p57
      %p60 = scmp.ne.s32.totalorder %s43, %s59
      %p61 = scmp.eq.s32.totalorder %s21, 0
      %p62 = por %p60, %p61
      %s64 = sadd.s32 %s63, 1
      %p67 = scmp.eq.s32.totalorder %s15, 1
      %p68 = scmp.ne.s32.totalorder %s63, %s65
      %p69 = scmp.eq.s32.totalorder %s15, 0
      %p70 = por %p68, %p69
      %p71 = scmp.ne.s32.totalorder %s63, %s65
      %p72 = scmp.eq.s32.totalorder %s20, 1
      %p73 = por %p71, %p72
      %p74 = scmp.ne.s32.totalorder %s65, %s66
      %p75 = scmp.eq.s32.totalorder %s20, 0
      %p76 = por %p74, %p75
      %p77 = scmp.ne.s32.totalorder %s65, %s66
      %p78 = scmp.eq.s32.totalorder %s21, 1
      %p79 = por %p77, %p78
      %p81 = scmp.ne.s32.totalorder %s66, %s80
      %p82 = scmp.eq.s32.totalorder %s21, 0
      %p83 = por %p81, %p82
      %s84 = ssub.s32 %s22, %s34
      %s85 = ssub.s32 %s23, %s30
      %s86 = sor.u32 %s84, %s85
      %p87 = scmp.eq.s32.totalorder %s86, 0
      %s89 = sadd.s32 %s88, 1
      %s90 = scalar_select %p87, %s88, %s89
      %p93 = pneg %p87
      %p94 = scmp.eq.s32.totalorder %s15, 1
      %p95 = por %p93, %p94
      %p96 = scmp.ne.s32.totalorder %s88, %s91
      %p97 = scmp.eq.s32.totalorder %s15, 0
      %p98 = por %p96, %p97
      %p99 = scmp.ne.s32.totalorder %s88, %s91
      %p100 = scmp.eq.s32.totalorder %s20, 1
      %p101 = por %p99, %p100
      %p102 = scmp.ne.s32.totalorder %s91, %s92
      %p103 = scmp.eq.s32.totalorder %s20, 0
      %p104 = por %p102, %p103
      %p105 = scmp.ne.s32.totalorder %s91, %s92
      %p106 = scmp.eq.s32.totalorder %s21, 1
      %p107 = por %p105, %p106
      %p109 = scmp.ne.s32.totalorder %s92, %s108
      %p110 = scmp.eq.s32.totalorder %s21, 0
      %p111 = por %p109, %p110
      %p112 = scmp.le.s32.totalorder 1, %s15
      %p113 = scmp.lt.s32.totalorder %s15, 3
      %p114 = pnand %p112, %p113
      %p115 = pneg %p114
      // Predicated region
      $region9: #{tpu_custom_call.1} parent=5 // pred_check
        _
      $region10: #{tpu_custom_call.1} parent=5 // pred_check_branch
        %117 = sbr.rel (%p114) target = $region12
      $region11: #{tpu_custom_call.1} parent=5 // pred_region
        %s118 = ssub.s32 %s15, 1
        // Predicated region
        $region13: #{tpu_custom_call.1} parent=11 // pred_check
          %p119 = pneg %p76
        $region14: #{tpu_custom_call.1} parent=11 // pred_check_branch
          %121 = sbr.rel (%p119) target = $region16
        $region15: #{tpu_custom_call.1} parent=11 // pred_region
          %s123 = ssub.s32 2048, 2048
          %124 = vsyncadd [#allocation6], %s123
          %s125 = sshll.u32 [#allocation5], 4
          %s126 = int_to_ptr.vmem [resolvable:$true] %s125
          %131 = dma.hbm_to_vmem [thread:$0]  %s1, 2048, %s126, [#allocation6], 128, 128, 8
        $region16: #{tpu_custom_call.1} parent=11 // pred_fallthru
          _
      $region12: #{tpu_custom_call.1} parent=5 // pred_fallthru
        _
      %p132 = scmp.lt.s32.totalorder %s15, 2
      // Predicated region
      $region17: #{tpu_custom_call.1} parent=5 // pred_check
        %p133 = pneg %p132
      $region18: #{tpu_custom_call.1} parent=5 // pred_check_branch
        %135 = sbr.rel (%p133) target = $region20
      $region19: #{tpu_custom_call.1} parent=5 // pred_region
        // Predicated region
        $region21: #{tpu_custom_call.1} parent=19 // pred_check
          %p136 = pneg %p49
        $region22: #{tpu_custom_call.1} parent=19 // pred_check_branch
          %138 = sbr.rel (%p136) target = $region24
        $region23: #{tpu_custom_call.1} parent=19 // pred_region
          %s139 = sand.u32 %s39, 1
          %s140 = scalar_lea.sflag [#allocation3], %s139
          %s141 = sand.u32 %s39, 1
          %s142 = smul.addr %s141, 256
          %s143 = scalar_lea.vmem [#allocation2], %s142
          %s144 = smul.u32 32, %s23
          %s146 = ssub.s32 4096, 4096
          %147 = vsyncadd %s140, %s146
          %s148 = smul.addr %s22, 32
          %s149 = sadd.s32 %s144, %s148
          %s150 = smul.addr %s149, 128
          %s151 = scalar_lea.hbm %s0, %s150
          %s152 = sshll.u32 %s143, 4
          %s153 = int_to_ptr.vmem [resolvable:$true] %s152
          %158 = dma.hbm_to_vmem [thread:$0]  %s151, 4096, %s153, %s140, 128, 128, 8
        $region24: #{tpu_custom_call.1} parent=19 // pred_fallthru
          _
      $region20: #{tpu_custom_call.1} parent=5 // pred_fallthru
        _
      %p159 = scmp.le.s32.totalorder 1, %s15
      %p160 = scmp.lt.s32.totalorder %s15, 3
      %p161 = pnand %p159, %p160
      %p162 = pneg %p161
      // Predicated region
      $region25: #{tpu_custom_call.1} parent=5 // pred_check
        _
      $region26: #{tpu_custom_call.1} parent=5 // pred_check_branch
        %164 = sbr.rel (%p161) target = $region28
      $region27: #{tpu_custom_call.1} parent=5 // pred_region
        %s165 = ssub.s32 %s15, 1
        %s166 = sand.u32 %s42, 1
        %s167 = scalar_lea.sflag [#allocation3], %s166
        %s168 = sand.u32 %s42, 1
        %s169 = smul.addr %s168, 256
        %s170 = scalar_lea.vmem [#allocation2], %s169
        // Predicated region
        $region29: #{tpu_custom_call.1} parent=27 // pred_check
          %p171 = pneg %p55
        $region30: #{tpu_custom_call.1} parent=27 // pred_check_branch
          %173 = sbr.rel (%p171) target = $region32
        $region31: #{tpu_custom_call.1} parent=27 // pred_region
          %174 = dma.done %s167, 4096
        $region32: #{tpu_custom_call.1} parent=27 // pred_fallthru
          _
        // Predicated region
        $region33: #{tpu_custom_call.1} parent=27 // pred_check
          %p175 = pneg %p76
        $region34: #{tpu_custom_call.1} parent=27 // pred_check_branch
          %177 = sbr.rel (%p175) target = $region36
        $region35: #{tpu_custom_call.1} parent=27 // pred_region
          %178 = dma.done [#allocation6], 2048
        $region36: #{tpu_custom_call.1} parent=27 // pred_fallthru
          _
        %s179 = sand.u32 %s42, 1
        %s180 = scalar_lea.sflag [#allocation3], %s179
        %s181 = sand.u32 %s42, 1
        %s182 = smul.addr %s181, 256
        %s183 = scalar_lea.vmem [#allocation2], %s182
        %p184 = pneg %p55
        %p185 = pneg %p52
        %p186 = pneg %p76
        %p187 = pneg %p73
        %p188 = pneg %p104
        %p189 = pneg %p101
        %s190 = sand.u32 %s91, 1
        %s191 = scalar_lea.sflag [#allocation4], %s190
        %s192 = sand.u32 %s91, 1
        %s193 = smul.addr %s192, 256
        %s194 = scalar_lea.vmem [#allocation7], %s193
        %s195 = smul.u32 32, %s25
        %s196 = smul.u32 32, %s25
        %v197 = vld [vmem:[%s170] sm:$0xff]
        %v198 = vld [vmem:[%s170 + $0x8] sm:$0xff]
        %v199 = vld [vmem:[%s170 + $0x10] sm:$0xff]
        %v200 = vld [vmem:[%s170 + $0x18] sm:$0xff]
        %v201 = vld [vmem:[%s170 + $0x20] sm:$0xff]
        %v202 = vld [vmem:[%s170 + $0x28] sm:$0xff]
        %v203 = vld [vmem:[%s170 + $0x30] sm:$0xff]
        %v204 = vld [vmem:[%s170 + $0x38] sm:$0xff]
        %v205 = vld [vmem:[%s170 + $0x40] sm:$0xff]
        %v206 = vld [vmem:[%s170 + $0x48] sm:$0xff]
        %v207 = vld [vmem:[%s170 + $0x50] sm:$0xff]
        %v208 = vld [vmem:[%s170 + $0x58] sm:$0xff]
        %v209 = vld [vmem:[%s170 + $0x60] sm:$0xff]
        %v210 = vld [vmem:[%s170 + $0x68] sm:$0xff]
        %v211 = vld [vmem:[%s170 + $0x70] sm:$0xff]
        %v212 = vld [vmem:[%s170 + $0x78] sm:$0xff]
        %v213 = vld [vmem:[%s170 + $0x80] sm:$0xff]
        %v214 = vld [vmem:[%s170 + $0x88] sm:$0xff]
        %v215 = vld [vmem:[%s170 + $0x90] sm:$0xff]
        %v216 = vld [vmem:[%s170 + $0x98] sm:$0xff]
        %v217 = vld [vmem:[%s170 + $0xa0] sm:$0xff]
        %v218 = vld [vmem:[%s170 + $0xa8] sm:$0xff]
        %v219 = vld [vmem:[%s170 + $0xb0] sm:$0xff]
        %v220 = vld [vmem:[%s170 + $0xb8] sm:$0xff]
        %v221 = vld [vmem:[%s170 + $0xc0] sm:$0xff]
        %v222 = vld [vmem:[%s170 + $0xc8] sm:$0xff]
        %v223 = vld [vmem:[%s170 + $0xd0] sm:$0xff]
        %v224 = vld [vmem:[%s170 + $0xd8] sm:$0xff]
        %v225 = vld [vmem:[%s170 + $0xe0] sm:$0xff]
        %v226 = vld [vmem:[%s170 + $0xe8] sm:$0xff]
        %v227 = vld [vmem:[%s170 + $0xf0] sm:$0xff]
        %v228 = vld [vmem:[%s170 + $0xf8] sm:$0xff]
        %v229 = vld [vmem:[#allocation5] sm:$0xff]
        %v230 = vld [vmem:[#allocation5 + $0x8] sm:$0xff]
        %v231 = vld [vmem:[#allocation5 + $0x10] sm:$0xff]
        %v232 = vld [vmem:[#allocation5 + $0x18] sm:$0xff]
        %v233 = vld [vmem:[#allocation5 + $0x20] sm:$0xff]
        %v234 = vld [vmem:[#allocation5 + $0x28] sm:$0xff]
        %v235 = vld [vmem:[#allocation5 + $0x30] sm:$0xff]
        %v236 = vld [vmem:[#allocation5 + $0x38] sm:$0xff]
        %v237 = vld [vmem:[#allocation5 + $0x40] sm:$0xff]
        %v238 = vld [vmem:[#allocation5 + $0x48] sm:$0xff]
        %v239 = vld [vmem:[#allocation5 + $0x50] sm:$0xff]
        %v240 = vld [vmem:[#allocation5 + $0x58] sm:$0xff]
        %v241 = vld [vmem:[#allocation5 + $0x60] sm:$0xff]
        %v242 = vld [vmem:[#allocation5 + $0x68] sm:$0xff]
        %v243 = vld [vmem:[#allocation5 + $0x70] sm:$0xff]
        %v244 = vld [vmem:[#allocation5 + $0x78] sm:$0xff]
        %245 = vmatprep.subr.mxu0 0.0
        %246 = vmatpush1.msra.mxu0 %v244
        %247 = vmatprep.subr.mxu0 0.0
        %248 = vmatpush1.msra.mxu0 %v243
        %249 = vmatprep.subr.mxu0 0.0
        %250 = vmatpush1.msra.mxu0 %v242
        %251 = vmatprep.subr.mxu0 0.0
        %252 = vmatpush1.msra.mxu0 %v241
        %253 = vmatprep.subr.mxu0 0.0
        %254 = vmatpush1.msra.mxu0 %v240
        %255 = vmatprep.subr.mxu0 0.0
        %256 = vmatpush1.msra.mxu0 %v239
        %257 = vmatprep.subr.mxu0 0.0
        %258 = vmatpush1.msra.mxu0 %v238
        %259 = vmatprep.subr.mxu0 0.0
        %260 = vmatpush1.msra.mxu0 %v237
        %261 = vmatprep.subr.mxu0 0.0
        %262 = vmatpush1.msra.mxu0 %v236
        %263 = vmatprep.subr.mxu0 0.0
        %264 = vmatpush1.msra.mxu0 %v235
        %265 = vmatprep.subr.mxu0 0.0
        %266 = vmatpush1.msra.mxu0 %v234
        %267 = vmatprep.subr.mxu0 0.0
        %268 = vmatpush1.msra.mxu0 %v233
        %269 = vmatprep.subr.mxu0 0.0
        %270 = vmatpush1.msra.mxu0 %v232
        %271 = vmatprep.subr.mxu0 0.0
        %272 = vmatpush1.msra.mxu0 %v231
        %273 = vmatprep.subr.mxu0 0.0
        %274 = vmatpush1.msra.mxu0 %v230
        %275 = vmatprep.subr.mxu0 0.0
        %276 = vmatpush1.msra.mxu0 %v229
        %277 = vmatprep.subr.mxu0 0.0
        %278 = vmatpush2.msra.mxu0 0.0
        %279 = vmatprep.subr.mxu0 0.0
        %280 = vmatpush2.msra.mxu0 0.0
        %281 = vmatprep.subr.mxu0 0.0
        %282 = vmatpush2.msra.mxu0 0.0
        %283 = vmatprep.subr.mxu0 0.0
        %284 = vmatpush2.msra.mxu0 0.0
        %285 = vmatprep.subr.mxu0 0.0
        %286 = vmatpush2.msra.mxu0 0.0
        %287 = vmatprep.subr.mxu0 0.0
        %288 = vmatpush2.msra.mxu0 0.0
        %289 = vmatprep.subr.mxu0 0.0
        %290 = vmatpush2.msra.mxu0 0.0
        %291 = vmatprep.subr.mxu0 0.0
        %292 = vmatpush2.msra.mxu0 0.0
        %293 = vmatprep.subr.mxu0 0.0
        %294 = vmatpush2.msra.mxu0 0.0
        %295 = vmatprep.subr.mxu0 0.0
        %296 = vmatpush2.msra.mxu0 0.0
        %297 = vmatprep.subr.mxu0 0.0
        %298 = vmatpush2.msra.mxu0 0.0
        %299 = vmatprep.subr.mxu0 0.0
        %300 = vmatpush2.msra.mxu0 0.0
        %301 = vmatprep.subr.mxu0 0.0
        %302 = vmatpush2.msra.mxu0 0.0
        %303 = vmatprep.subr.mxu0 0.0
        %304 = vmatpush2.msra.mxu0 0.0
        %305 = vmatprep.subr.mxu0 0.0
        %306 = vmatpush2.msra.mxu0 0.0
        %307 = vmatprep.subr.mxu0 0.0
        %308 = vmatpush2.msra.mxu0 0.0
        %309 = vmatprep.mubr.f32.mxu0 0.0
        %310 = vmatmul.mubr.f32.gmra.mxu0 %v197
        %v311 = vpop.f32.mrf.mxu0
        %v312 = vadd.f32 0.0, %v311
        %v313 = vpop.f32.mrf.mxu0
        %314 = vmatprep.mubr.f32.mxu0 0.0
        %315 = vmatmul.mubr.f32.gmra.mxu0 %v198
        %v316 = vpop.f32.mrf.mxu0
        %v317 = vadd.f32 0.0, %v316
        %v318 = vpop.f32.mrf.mxu0
        %319 = vmatprep.mubr.f32.mxu0 0.0
        %320 = vmatmul.mubr.f32.gmra.mxu0 %v199
        %v321 = vpop.f32.mrf.mxu0
        %v322 = vadd.f32 0.0, %v321
        %v323 = vpop.f32.mrf.mxu0
        %324 = vmatprep.mubr.f32.mxu0 0.0
        %325 = vmatmul.mubr.f32.gmra.mxu0 %v200
        %v326 = vpop.f32.mrf.mxu0
        %v327 = vadd.f32 0.0, %v326
        %v328 = vpop.f32.mrf.mxu0
        %329 = vmatprep.mubr.f32.mxu0 0.0
        %330 = vmatmul.mubr.f32.gmra.mxu0 %v201
        %v331 = vpop.f32.mrf.mxu0
        %v332 = vadd.f32 0.0, %v331
        %v333 = vpop.f32.mrf.mxu0
        %334 = vmatprep.mubr.f32.mxu0 0.0
        %335 = vmatmul.mubr.f32.gmra.mxu0 %v202
        %v336 = vpop.f32.mrf.mxu0
        %v337 = vadd.f32 0.0, %v336
        %v338 = vpop.f32.mrf.mxu0
        %339 = vmatprep.mubr.f32.mxu0 0.0
        %340 = vmatmul.mubr.f32.gmra.mxu0 %v203
        %v341 = vpop.f32.mrf.mxu0
        %v342 = vadd.f32 0.0, %v341
        %v343 = vpop.f32.mrf.mxu0
        %344 = vmatprep.mubr.f32.mxu0 0.0
        %345 = vmatmul.mubr.f32.gmra.mxu0 %v204
        %v346 = vpop.f32.mrf.mxu0
        %v347 = vadd.f32 0.0, %v346
        %v348 = vpop.f32.mrf.mxu0
        %349 = vmatprep.mubr.f32.mxu0 0.0
        %350 = vmatmul.mubr.f32.gmra.mxu0 %v205
        %v351 = vpop.f32.mrf.mxu0
        %v352 = vadd.f32 0.0, %v351
        %v353 = vpop.f32.mrf.mxu0
        %354 = vmatprep.mubr.f32.mxu0 0.0
        %355 = vmatmul.mubr.f32.gmra.mxu0 %v206
        %v356 = vpop.f32.mrf.mxu0
        %v357 = vadd.f32 0.0, %v356
        %v358 = vpop.f32.mrf.mxu0
        %359 = vmatprep.mubr.f32.mxu0 0.0
        %360 = vmatmul.mubr.f32.gmra.mxu0 %v207
        %v361 = vpop.f32.mrf.mxu0
        %v362 = vadd.f32 0.0, %v361
        %v363 = vpop.f32.mrf.mxu0
        %364 = vmatprep.mubr.f32.mxu0 0.0
        %365 = vmatmul.mubr.f32.gmra.mxu0 %v208
        %v366 = vpop.f32.mrf.mxu0
        %v367 = vadd.f32 0.0, %v366
        %v368 = vpop.f32.mrf.mxu0
        %369 = vmatprep.mubr.f32.mxu0 0.0
        %370 = vmatmul.mubr.f32.gmra.mxu0 %v209
        %v371 = vpop.f32.mrf.mxu0
        %v372 = vadd.f32 0.0, %v371
        %v373 = vpop.f32.mrf.mxu0
        %374 = vmatprep.mubr.f32.mxu0 0.0
        %375 = vmatmul.mubr.f32.gmra.mxu0 %v210
        %v376 = vpop.f32.mrf.mxu0
        %v377 = vadd.f32 0.0, %v376
        %v378 = vpop.f32.mrf.mxu0
        %379 = vmatprep.mubr.f32.mxu0 0.0
        %380 = vmatmul.mubr.f32.gmra.mxu0 %v211
        %v381 = vpop.f32.mrf.mxu0
        %v382 = vadd.f32 0.0, %v381
        %v383 = vpop.f32.mrf.mxu0
        %384 = vmatprep.mubr.f32.mxu0 0.0
        %385 = vmatmul.mubr.f32.gmra.mxu0 %v212
        %v386 = vpop.f32.mrf.mxu0
        %v387 = vadd.f32 0.0, %v386
        %v388 = vpop.f32.mrf.mxu0
        %389 = vmatprep.mubr.f32.mxu0 0.0
        %390 = vmatmul.mubr.f32.gmra.mxu0 %v213
        %v391 = vpop.f32.mrf.mxu0
        %v392 = vadd.f32 0.0, %v391
        %v393 = vpop.f32.mrf.mxu0
        %394 = vmatprep.mubr.f32.mxu0 0.0
        %395 = vmatmul.mubr.f32.gmra.mxu0 %v214
        %v396 = vpop.f32.mrf.mxu0
        %v397 = vadd.f32 0.0, %v396
        %v398 = vpop.f32.mrf.mxu0
        %399 = vmatprep.mubr.f32.mxu0 0.0
        %400 = vmatmul.mubr.f32.gmra.mxu0 %v215
        %v401 = vpop.f32.mrf.mxu0
        %v402 = vadd.f32 0.0, %v401
        %v403 = vpop.f32.mrf.mxu0
        %404 = vmatprep.mubr.f32.mxu0 0.0
        %405 = vmatmul.mubr.f32.gmra.mxu0 %v216
        %v406 = vpop.f32.mrf.mxu0
        %v407 = vadd.f32 0.0, %v406
        %v408 = vpop.f32.mrf.mxu0
        %409 = vmatprep.mubr.f32.mxu0 0.0
        %410 = vmatmul.mubr.f32.gmra.mxu0 %v217
        %v411 = vpop.f32.mrf.mxu0
        %v412 = vadd.f32 0.0, %v411
        %v413 = vpop.f32.mrf.mxu0
        %414 = vmatprep.mubr.f32.mxu0 0.0
        %415 = vmatmul.mubr.f32.gmra.mxu0 %v218
        %v416 = vpop.f32.mrf.mxu0
        %v417 = vadd.f32 0.0, %v416
        %v418 = vpop.f32.mrf.mxu0
        %419 = vmatprep.mubr.f32.mxu0 0.0
        %420 = vmatmul.mubr.f32.gmra.mxu0 %v219
        %v421 = vpop.f32.mrf.mxu0
        %v422 = vadd.f32 0.0, %v421
        %v423 = vpop.f32.mrf.mxu0
        %424 = vmatprep.mubr.f32.mxu0 0.0
        %425 = vmatmul.mubr.f32.gmra.mxu0 %v220
        %v426 = vpop.f32.mrf.mxu0
        %v427 = vadd.f32 0.0, %v426
        %v428 = vpop.f32.mrf.mxu0
        %429 = vmatprep.mubr.f32.mxu0 0.0
        %430 = vmatmul.mubr.f32.gmra.mxu0 %v221
        %v431 = vpop.f32.mrf.mxu0
        %v432 = vadd.f32 0.0, %v431
        %v433 = vpop.f32.mrf.mxu0
        %434 = vmatprep.mubr.f32.mxu0 0.0
        %435 = vmatmul.mubr.f32.gmra.mxu0 %v222
        %v436 = vpop.f32.mrf.mxu0
        %v437 = vadd.f32 0.0, %v436
        %v438 = vpop.f32.mrf.mxu0
        %439 = vmatprep.mubr.f32.mxu0 0.0
        %440 = vmatmul.mubr.f32.gmra.mxu0 %v223
        %v441 = vpop.f32.mrf.mxu0
        %v442 = vadd.f32 0.0, %v441
        %v443 = vpop.f32.mrf.mxu0
        %444 = vmatprep.mubr.f32.mxu0 0.0
        %445 = vmatmul.mubr.f32.gmra.mxu0 %v224
        %v446 = vpop.f32.mrf.mxu0
        %v447 = vadd.f32 0.0, %v446
        %v448 = vpop.f32.mrf.mxu0
        %449 = vmatprep.mubr.f32.mxu0 0.0
        %450 = vmatmul.mubr.f32.gmra.mxu0 %v225
        %v451 = vpop.f32.mrf.mxu0
        %v452 = vadd.f32 0.0, %v451
        %v453 = vpop.f32.mrf.mxu0
        %454 = vmatprep.mubr.f32.mxu0 0.0
        %455 = vmatmul.mubr.f32.gmra.mxu0 %v226
        %v456 = vpop.f32.mrf.mxu0
        %v457 = vadd.f32 0.0, %v456
        %v458 = vpop.f32.mrf.mxu0
        %459 = vmatprep.mubr.f32.mxu0 0.0
        %460 = vmatmul.mubr.f32.gmra.mxu0 %v227
        %v461 = vpop.f32.mrf.mxu0
        %v462 = vadd.f32 0.0, %v461
        %v463 = vpop.f32.mrf.mxu0
        %464 = vmatprep.mubr.f32.mxu0 0.0
        %465 = vmatmul.mubr.f32.gmra.mxu0 %v228
        %v466 = vpop.f32.mrf.mxu0
        %v467 = vadd.f32 0.0, %v466
        %v468 = vpop.f32.mrf.mxu0
        %469 = vdwg.mxu0
        %470 = vst [vmem:[%s194] sm:$0xff] %v312
        %471 = vst [vmem:[%s194 + $0x8] sm:$0xff] %v317
        %472 = vst [vmem:[%s194 + $0x10] sm:$0xff] %v322
        %473 = vst [vmem:[%s194 + $0x18] sm:$0xff] %v327
        %474 = vst [vmem:[%s194 + $0x20] sm:$0xff] %v332
        %475 = vst [vmem:[%s194 + $0x28] sm:$0xff] %v337
        %476 = vst [vmem:[%s194 + $0x30] sm:$0xff] %v342
        %477 = vst [vmem:[%s194 + $0x38] sm:$0xff] %v347
        %478 = vst [vmem:[%s194 + $0x40] sm:$0xff] %v352
        %479 = vst [vmem:[%s194 + $0x48] sm:$0xff] %v357
        %480 = vst [vmem:[%s194 + $0x50] sm:$0xff] %v362
        %481 = vst [vmem:[%s194 + $0x58] sm:$0xff] %v367
        %482 = vst [vmem:[%s194 + $0x60] sm:$0xff] %v372
        %483 = vst [vmem:[%s194 + $0x68] sm:$0xff] %v377
        %484 = vst [vmem:[%s194 + $0x70] sm:$0xff] %v382
        %485 = vst [vmem:[%s194 + $0x78] sm:$0xff] %v387
        %486 = vst [vmem:[%s194 + $0x80] sm:$0xff] %v392
        %487 = vst [vmem:[%s194 + $0x88] sm:$0xff] %v397
        %488 = vst [vmem:[%s194 + $0x90] sm:$0xff] %v402
        %489 = vst [vmem:[%s194 + $0x98] sm:$0xff] %v407
        %490 = vst [vmem:[%s194 + $0xa0] sm:$0xff] %v412
        %491 = vst [vmem:[%s194 + $0xa8] sm:$0xff] %v417
        %492 = vst [vmem:[%s194 + $0xb0] sm:$0xff] %v422
        %493 = vst [vmem:[%s194 + $0xb8] sm:$0xff] %v427
        %494 = vst [vmem:[%s194 + $0xc0] sm:$0xff] %v432
        %495 = vst [vmem:[%s194 + $0xc8] sm:$0xff] %v437
        %496 = vst [vmem:[%s194 + $0xd0] sm:$0xff] %v442
        %497 = vst [vmem:[%s194 + $0xd8] sm:$0xff] %v447
        %498 = vst [vmem:[%s194 + $0xe0] sm:$0xff] %v452
        %499 = vst [vmem:[%s194 + $0xe8] sm:$0xff] %v457
        %500 = vst [vmem:[%s194 + $0xf0] sm:$0xff] %v462
        %501 = vst [vmem:[%s194 + $0xf8] sm:$0xff] %v467
        %s502 = sand.u32 %s91, 1
        %s503 = scalar_lea.sflag [#allocation4], %s502
        %s504 = sand.u32 %s91, 1
        %s505 = smul.addr %s504, 256
        %s506 = scalar_lea.vmem [#allocation7], %s505
        // Predicated region
        $region37: #{tpu_custom_call.1} parent=27 // pred_check
          %p507 = pneg %p101
        $region38: #{tpu_custom_call.1} parent=27 // pred_check_branch
          %509 = sbr.rel (%p507) target = $region40
        $region39: #{tpu_custom_call.1} parent=27 // pred_region
          %s510 = smul.u32 32, %s25
          %s512 = ssub.s32 4096, 4096
          %513 = vsyncadd %s503, %s512
          %s514 = smul.addr %s24, 32
          %s515 = sadd.s32 %s510, %s514
          %s516 = smul.addr %s515, 128
          %s517 = scalar_lea.hbm %s2, %s516
          %s518 = sshll.u32 %s506, 4
          %s519 = int_to_ptr.vmem [resolvable:$true] %s518
          %524 = dma.vmem_to_hbm [thread:$0]  %s519, 4096, %s517, %s503, 128, 128, 8
        $region40: #{tpu_custom_call.1} parent=27 // pred_fallthru
          _
      $region28: #{tpu_custom_call.1} parent=5 // pred_fallthru
        _
      %p525 = scmp.le.s32.totalorder 2, %s15
      // Predicated region
      $region41: #{tpu_custom_call.1} parent=5 // pred_check
        %p526 = pneg %p525
      $region42: #{tpu_custom_call.1} parent=5 // pred_check_branch
        %528 = sbr.rel (%p526) target = $region44
      $region43: #{tpu_custom_call.1} parent=5 // pred_region
        %s529 = ssub.s32 %s15, 2
        // Predicated region
        $region45: #{tpu_custom_call.1} parent=43 // pred_check
          %p530 = pneg %p107
        $region46: #{tpu_custom_call.1} parent=43 // pred_check_branch
          %532 = sbr.rel (%p530) target = $region48
        $region47: #{tpu_custom_call.1} parent=43 // pred_region
          %s533 = sand.u32 %s92, 1
          %s534 = scalar_lea.sflag [#allocation4], %s533
          %s535 = sand.u32 %s92, 1
          %s536 = smul.addr %s535, 256
          %s537 = scalar_lea.vmem [#allocation7], %s536
          %538 = dma.done %s534, 4096
        $region48: #{tpu_custom_call.1} parent=43 // pred_fallthru
          _
      $region44: #{tpu_custom_call.1} parent=5 // pred_fallthru
        _
    $region6: #{tpu_custom_call.1} parent=1 // loop_footer
      %s19 = sadd.s32 1, %s15
    $region7: #{tpu_custom_call.1} parent=1 // loop_footer_branch
      %14 = sbr.rel target = $region3
    $region8: #{tpu_custom_call.1} parent=1 // loop_exit
      _
    %539 = vsyncpa [#allocation3], 1
    %s540 = scalar_lea.sflag [#allocation3], 1
    %541 = vsyncpa %s540, 1
    %542 = vsyncpa [#allocation6], 1
    %543 = vsyncpa [#allocation4], 1
    %s544 = scalar_lea.sflag [#allocation4], 1
    %545 = vsyncpa %s544, 1

</llo_original>
